<compile_context>
chip_gen: v6e
topology: v6e:2x2x1
jax: 0.10.0
libtpu: 0.0.40
codegen_flags: <defaults>
</compile_context>

<pallas_src>
import jax
import jax.numpy as jnp
import numpy as np
from jax.experimental import pallas as pl
from jax.experimental.pallas import tpu as pltpu

NFEATS = 8
WIDTH = 32
DEPTH = 3
DOWN_T = 2
STRIDE_T = 2          # even stride assumed (matches typical VQ-VAE configs)
DIL_RATE = 2
BATCH = 2
T_IN = 8              # quantized length = seq_len // down_t -> output length = T_IN * stride_t

assert STRIDE_T % 2 == 0           # TODO(synk): odd stride_t gives output length s*T+1; not handled.
assert STRIDE_T * NFEATS <= WIDTH  # fused tconv+output_proj columns are zero-padded up to WIDTH lanes.


def decoder_kernel(q_ref, w_ref, out_ref):
    B, T, W = q_ref.shape             # whole batch, seq len, channels
    R = B * T                         # all rows processed in this single step
    f32 = jnp.float32

    # One iota feeds every shift mask (row phase inside each sequence).
    t_idx = jax.lax.broadcasted_iota(jnp.int32, (R, W), 0) % T
    ones = jnp.ones((R, W), f32)      # bias block; bias row lives in the weight slab

    def shifted(v, off):
        # tap[row] = v[row + off] within its own sequence, 0 outside [0, T).
        # TODO(synk): if T is ever tiled across grid steps, halo rows are needed here.
        r = pltpu.roll(v, shift=(-off) % R, axis=0)            # XLU slot (free-ish)
        m = (t_idx < T - off) if off > 0 else (t_idx >= -off)  # single compare per offset
        return jnp.where(m, r, 0.0)

    def layer(prev, cent, nxt, col):
        # im2col lane-concat -> one [R, 4W] @ [4W, W] MXU dot (bias via ones block).
        cat = jnp.concatenate([prev, cent, nxt, ones], axis=1)              # [R, 128]
        return jnp.dot(cat, w_ref[:, pl.ds(col, W)], preferred_element_type=f32)

    x = q_ref[...].reshape(R, W)

    # input_proj: Linear(width, width). Dead tap slots multiply all-zero weight
    # rows, so reusing x there is exact and avoids extra rolls/zero fills.
    x = layer(x, x, x, 0)

    # dilated Conv1d(width, width, k=3, dilation=d, padding=d) + ReLU
    for i in range(DEPTH - 1):
        d = DIL_RATE ** (DEPTH - 1 - i)
        x = jnp.maximum(layer(shifted(x, -d), x, shifted(x, +d), (1 + i) * W), 0.0)

    # ConvTranspose1d(width, width, kernel=2s, stride=s, padding=s//2) fused with
    # output_proj: one dot whose first s*F columns hold all s output phases.
    y = layer(shifted(x, -1), x, shifted(x, +1), DEPTH * W)
    out_ref[...] = y.reshape(B, T, W).astype(out_ref.dtype)     # dense 32-lane store


def pack_params(params):
    """One-time wrapper-side repack into a single lane-dense [4W, (DEPTH+1)*W] slab.

    Column block j (W lanes) holds layer j's weight. Rows 0..W-1 / W..2W-1 /
    2W..3W-1 are the tap(-d) / tap(0) / tap(+d) im2col blocks along the
    contraction axis, row 3W is the bias row (paired with the kernel's ones
    block), remaining rows are zero. output_proj is folded into the
    transpose-conv taps and bias of the last block."""
    Wi, bi, cw, cb, tw, tb, Wo, bo = params
    W, F, s = WIDTH, NFEATS, STRIDE_T
    pad, K, SF = s // 2, 2 * s, s * F

    blocks = []

    # block 0: input_proj — weight at the center-tap rows, bias at row 3W.
    blk = jnp.zeros((4 * W, W), jnp.float32)
    blk = blk.at[W:2 * W, :].set(Wi)
    blk = blk.at[3 * W, :].set(bi[0])
    blocks.append(blk)

    # blocks 1..DEPTH-1: dilated conv taps (row order: tap(-d), tap(0), tap(+d)).
    for i in range(DEPTH - 1):
        blk = jnp.zeros((4 * W, W), jnp.float32)
        blk = blk.at[:3 * W, :].set(cw[i].reshape(3 * W, W))
        blk = blk.at[3 * W, :].set(cb[i])
        blocks.append(blk)

    # block DEPTH: ConvTranspose1d folded with output_proj.
    # phase r: y[s*m + r] = x[m-1]@tw[r+pad+s] + x[m]@tw[r+pad] + x[m+1]@tw[r+pad-s] + tb
    zero = jnp.zeros((W, F), jnp.float32)
    phase_cols = []
    for r in range(s):
        prev_w = tw[r + pad + s] @ Wo if (r + pad + s) <= K - 1 else zero    # multiplies x[m-1]
        cent_w = tw[r + pad] @ Wo                                            # multiplies x[m]
        next_w = tw[r + pad - s] @ Wo if (r + pad - s) >= 0 else zero        # multiplies x[m+1]
        phase_cols.append(jnp.concatenate([prev_w, cent_w, next_w], axis=0))  # [3W, F]
    tconv_w = jnp.concatenate(phase_cols, axis=1)                            # [3W, SF]
    tconv_b = jnp.tile(tb @ Wo + bo, (1, s))                                 # [1, SF]
    blk = jnp.zeros((4 * W, W), jnp.float32)
    blk = blk.at[:3 * W, :SF].set(tconv_w)
    blk = blk.at[3 * W, :SF].set(tconv_b[0])
    blocks.append(blk)

    return jnp.concatenate(blocks, axis=1)            # [4W, (DEPTH+1)*W] = [128, 128]


def myoskeleton_decoder(quantized, w_pack):
    B, T, W = quantized.shape
    s, F = STRIDE_T, NFEATS
    SF = s * F
    # Single grid step: this shape is launch/DMA bound; v5e/v6e are single-TC and
    # 16 rows is far too little work to shard across v7x's two cores.
    # TODO(synk): for production shapes (>=256-512 rows) tile rows per step and
    # use CORE_PARALLEL / pl.core_map — plain "parallel" does not shard across TCs.
    out = pl.pallas_call(
        decoder_kernel,
        out_shape=jax.ShapeDtypeStruct((B, T, W), jnp.float32),
        grid_spec=pltpu.PrefetchScalarGridSpec(
            num_scalar_prefetch=0,
            grid=(1,),
            in_specs=[
                pl.BlockSpec((B, T, W), lambda b: (0, 0, 0)),
                pl.BlockSpec(w_pack.shape, lambda b: (0, 0)),
            ],
            out_specs=pl.BlockSpec((B, T, W), lambda b: (0, 0, 0)),
        ),
        compiler_params=pltpu.CompilerParams(dimension_semantics=("arbitrary",)),
    )(quantized, w_pack)
    # drop the zero-padded lanes and interleave the s phases: pure metadata ops.
    return out[:, :, :SF].reshape(B, T * s, F)


def init_params(key):
    ks = jax.random.split(key, 8)
    sc = 0.1
    Wi = sc * jax.random.normal(ks[0], (WIDTH, WIDTH), jnp.float32)                 # input_proj W (in, out)
    bi = sc * jax.random.normal(ks[1], (1, WIDTH), jnp.float32)                     # input_proj b
    cw = sc * jax.random.normal(ks[2], (DEPTH - 1, 3, WIDTH, WIDTH), jnp.float32)   # conv taps [layer, k, in, out]
    cb = sc * jax.random.normal(ks[3], (DEPTH - 1, WIDTH), jnp.float32)
    tw = sc * jax.random.normal(ks[4], (2 * STRIDE_T, WIDTH, WIDTH), jnp.float32)   # tconv taps [k, in, out]
    tb = sc * jax.random.normal(ks[5], (1, WIDTH), jnp.float32)
    Wo = sc * jax.random.normal(ks[6], (WIDTH, NFEATS), jnp.float32)                # output_proj W (in, out)
    bo = sc * jax.random.normal(ks[7], (1, NFEATS), jnp.float32)
    return (Wi, bi, cw, cb, tw, tb, Wo, bo)


def reference_forward(quantized, params):
    """Pure-JAX reference matching PyTorch Conv1d / ConvTranspose1d semantics."""
    Wi, bi, cw, cb, tw, tb, Wo, bo = params
    x = quantized @ Wi + bi                      # [B, T, W]
    x = jnp.transpose(x, (0, 2, 1))              # NCW
    dn = ('NCH', 'OIH', 'NCH')
    for i in range(DEPTH - 1):
        d = DIL_RATE ** (DEPTH - 1 - i)
        w_oik = jnp.transpose(cw[i], (2, 1, 0))  # [out, in, K]
        x = jax.lax.conv_general_dilated(x, w_oik, window_strides=(1,),
                                         padding=[(d, d)], rhs_dilation=(d,),
                                         dimension_numbers=dn)
        x = x + cb[i][None, :, None]
        x = jnp.maximum(x, 0.0)
    s = STRIDE_T
    pad = s // 2
    K = 2 * s
    # ConvTranspose1d == forward conv on zero-upsampled input with flipped kernel
    wprime = jnp.transpose(jnp.flip(tw, axis=0), (2, 1, 0))  # [out, in, K]
    x = jax.lax.conv_general_dilated(x, wprime, window_strides=(1,),
                                     padding=[(K - 1 - pad, K - 1 - pad)],
                                     lhs_dilation=(s,), dimension_numbers=dn)
    x = x + tb[0][None, :, None]
    x = jnp.transpose(x, (0, 2, 1))              # [B, s*T, W]
    return x @ Wo + bo


if __name__ == "__main__":
    key = jax.random.PRNGKey(0)
    pkey, xkey = jax.random.split(key)
    params = init_params(pkey)
    w_pack = pack_params(params)
    quantized = jax.random.normal(xkey, (BATCH, T_IN, WIDTH), jnp.float32)

    motion = jax.block_until_ready(myoskeleton_decoder(quantized, w_pack))
    assert motion.shape == (BATCH, T_IN * STRIDE_T, NFEATS), motion.shape

    ref = jax.block_until_ready(reference_forward(quantized, params))
    assert np.allclose(np.asarray(motion), np.asarray(ref), rtol=1e-4, atol=1e-4)

    print("KERNEL_OK")
</pallas_src>

<mosaic_0001>
module attributes {stable_mosaic.version = 11 : i64} {
  func.func @decoder_kernel(%arg0: i32, %arg1: memref<2x8x32xf32, #tpu.memory_space<vmem>>, %arg2: memref<128x128xf32, #tpu.memory_space<vmem>>, %arg3: memref<2x8x32xf32, #tpu.memory_space<vmem>>) attributes {dimension_semantics = [#tpu.dimension_semantics<arbitrary>], iteration_bounds = array<i64: 1>, scalar_prefetch = 0 : i64, scratch_operands = 0 : i64, tpu.core_type = #tpu.core_type<tc>, window_params = [{pipeline_mode = #tpu.pipeline_mode<synchronous>, transform_indices = @transform_0, window_bounds = array<i64: 2, 8, 32>}, {pipeline_mode = #tpu.pipeline_mode<synchronous>, transform_indices = @transform_1, window_bounds = array<i64: 128, 128>}, {pipeline_mode = #tpu.pipeline_mode<synchronous>, transform_indices = @transform_2, window_bounds = array<i64: 2, 8, 32>}]} {
    %0 = tpu.iota {dimensions = array<i32: 0>} : vector<16x32xi32>
    %c8_i32 = arith.constant 8 : i32
    %c0_i32 = arith.constant 0 : i32
    %1 = arith.cmpi eq, %c8_i32, %c0_i32 : i32
    %c1_i32 = arith.constant 1 : i32
    %2 = arith.select %1, %c1_i32, %c8_i32 : i32
    %3 = vector.broadcast %2 : i32 to vector<16x32xi32>
    %4 = arith.remsi %0, %3 : vector<16x32xi32>
    %c0_i32_0 = arith.constant 0 : i32
    %5 = vector.broadcast %c0_i32_0 : i32 to vector<16x32xi32>
    %6 = arith.cmpi ne, %4, %5 : vector<16x32xi32>
    %c0_i32_1 = arith.constant 0 : i32
    %7 = vector.broadcast %c0_i32_1 : i32 to vector<16x32xi32>
    %8 = arith.cmpi slt, %4, %7 : vector<16x32xi32>
    %c0_i32_2 = arith.constant 0 : i32
    %9 = arith.cmpi slt, %2, %c0_i32_2 : i32
    %10 = vector.broadcast %9 : i1 to vector<16x32xi1>
    %11 = vector.broadcast %10 : vector<16x32xi1> to vector<16x32xi1>
    %12 = arith.xori %8, %11 : vector<16x32xi1>
    %13 = arith.andi %12, %6 : vector<16x32xi1>
    %14 = vector.broadcast %2 : i32 to vector<16x32xi32>
    %15 = arith.addi %4, %14 : vector<16x32xi32>
    %16 = arith.select %13, %15, %4 : vector<16x32xi1>, vector<16x32xi32>
    %cst = arith.constant 1.000000e+00 : f32
    %17 = vector.broadcast %cst : f32 to vector<16x32xf32>
    %c0 = arith.constant 0 : index
    %c0_3 = arith.constant 0 : index
    %c0_4 = arith.constant 0 : index
    %18 = vector.load %arg1[%c0, %c0_3, %c0_4] : memref<2x8x32xf32, #tpu.memory_space<vmem>>, vector<2x8x32xf32>
    %19 = vector.shape_cast %18 : vector<2x8x32xf32> to vector<16x32xf32>
    %20 = tpu.concatenate %19, %19, %19, %17 in 1 : vector<16x32xf32>, vector<16x32xf32>, vector<16x32xf32>, vector<16x32xf32> -> vector<16x128xf32>
    %c0_5 = arith.constant 0 : index
    %c0_6 = arith.constant 0 : index
    %21 = vector.load %arg2[%c0_5, %c0_6] : memref<128x128xf32, #tpu.memory_space<vmem>>, vector<128x32xf32>
    %cst_7 = arith.constant dense<0.000000e+00> : vector<16x32xf32>
    %22 = tpu.matmul %20, %21, %cst_7 {dimension_numbers = #tpu.dot_dimension_numbers<[1], [0], [0], [1], [0, 0, 1, 1], [], []>} : vector<16x128xf32>, vector<128x32xf32>, vector<16x32xf32> -> vector<16x32xf32>
    %c4_i32 = arith.constant 4 : i32
    %23 = tpu.dynamic_rotate %22 by %c4_i32 dim 0 : vector<16x32xf32>, i32 -> vector<16x32xf32>
    %c4_i32_8 = arith.constant 4 : i32
    %24 = vector.broadcast %c4_i32_8 : i32 to vector<16x32xi32>
    %25 = arith.cmpi sge, %16, %24 : vector<16x32xi32>
    %cst_9 = arith.constant 0.000000e+00 : f32
    %26 = vector.broadcast %cst_9 : f32 to vector<16x32xf32>
    %27 = arith.select %25, %23, %26 : vector<16x32xi1>, vector<16x32xf32>
    %c12_i32 = arith.constant 12 : i32
    %28 = tpu.dynamic_rotate %22 by %c12_i32 dim 0 : vector<16x32xf32>, i32 -> vector<16x32xf32>
    %c4_i32_10 = arith.constant 4 : i32
    %29 = vector.broadcast %c4_i32_10 : i32 to vector<16x32xi32>
    %30 = arith.cmpi slt, %16, %29 : vector<16x32xi32>
    %cst_11 = arith.constant 0.000000e+00 : f32
    %31 = vector.broadcast %cst_11 : f32 to vector<16x32xf32>
    %32 = arith.select %30, %28, %31 : vector<16x32xi1>, vector<16x32xf32>
    %33 = tpu.concatenate %27, %22, %32, %17 in 1 : vector<16x32xf32>, vector<16x32xf32>, vector<16x32xf32>, vector<16x32xf32> -> vector<16x128xf32>
    %c0_12 = arith.constant 0 : index
    %c32 = arith.constant 32 : index
    %34 = vector.load %arg2[%c0_12, %c32] : memref<128x128xf32, #tpu.memory_space<vmem>>, vector<128x32xf32>
    %cst_13 = arith.constant dense<0.000000e+00> : vector<16x32xf32>
    %35 = tpu.matmul %33, %34, %cst_13 {dimension_numbers = #tpu.dot_dimension_numbers<[1], [0], [0], [1], [0, 0, 1, 1], [], []>} : vector<16x128xf32>, vector<128x32xf32>, vector<16x32xf32> -> vector<16x32xf32>
    %cst_14 = arith.constant 0.000000e+00 : f32
    %36 = vector.broadcast %cst_14 : f32 to vector<16x32xf32>
    %37 = arith.maximumf %35, %36 : vector<16x32xf32>
    %c2_i32 = arith.constant 2 : i32
    %38 = tpu.dynamic_rotate %37 by %c2_i32 dim 0 : vector<16x32xf32>, i32 -> vector<16x32xf32>
    %c2_i32_15 = arith.constant 2 : i32
    %39 = vector.broadcast %c2_i32_15 : i32 to vector<16x32xi32>
    %40 = arith.cmpi sge, %16, %39 : vector<16x32xi32>
    %cst_16 = arith.constant 0.000000e+00 : f32
    %41 = vector.broadcast %cst_16 : f32 to vector<16x32xf32>
    %42 = arith.select %40, %38, %41 : vector<16x32xi1>, vector<16x32xf32>
    %c14_i32 = arith.constant 14 : i32
    %43 = tpu.dynamic_rotate %37 by %c14_i32 dim 0 : vector<16x32xf32>, i32 -> vector<16x32xf32>
    %c6_i32 = arith.constant 6 : i32
    %44 = vector.broadcast %c6_i32 : i32 to vector<16x32xi32>
    %45 = arith.cmpi slt, %16, %44 : vector<16x32xi32>
    %cst_17 = arith.constant 0.000000e+00 : f32
    %46 = vector.broadcast %cst_17 : f32 to vector<16x32xf32>
    %47 = arith.select %45, %43, %46 : vector<16x32xi1>, vector<16x32xf32>
    %48 = tpu.concatenate %42, %37, %47, %17 in 1 : vector<16x32xf32>, vector<16x32xf32>, vector<16x32xf32>, vector<16x32xf32> -> vector<16x128xf32>
    %c0_18 = arith.constant 0 : index
    %c64 = arith.constant 64 : index
    %49 = vector.load %arg2[%c0_18, %c64] : memref<128x128xf32, #tpu.memory_space<vmem>>, vector<128x32xf32>
    %cst_19 = arith.constant dense<0.000000e+00> : vector<16x32xf32>
    %50 = tpu.matmul %48, %49, %cst_19 {dimension_numbers = #tpu.dot_dimension_numbers<[1], [0], [0], [1], [0, 0, 1, 1], [], []>} : vector<16x128xf32>, vector<128x32xf32>, vector<16x32xf32> -> vector<16x32xf32>
    %cst_20 = arith.constant 0.000000e+00 : f32
    %51 = vector.broadcast %cst_20 : f32 to vector<16x32xf32>
    %52 = arith.maximumf %50, %51 : vector<16x32xf32>
    %c1_i32_21 = arith.constant 1 : i32
    %53 = tpu.dynamic_rotate %52 by %c1_i32_21 dim 0 : vector<16x32xf32>, i32 -> vector<16x32xf32>
    %c1_i32_22 = arith.constant 1 : i32
    %54 = vector.broadcast %c1_i32_22 : i32 to vector<16x32xi32>
    %55 = arith.cmpi sge, %16, %54 : vector<16x32xi32>
    %cst_23 = arith.constant 0.000000e+00 : f32
    %56 = vector.broadcast %cst_23 : f32 to vector<16x32xf32>
    %57 = arith.select %55, %53, %56 : vector<16x32xi1>, vector<16x32xf32>
    %c15_i32 = arith.constant 15 : i32
    %58 = tpu.dynamic_rotate %52 by %c15_i32 dim 0 : vector<16x32xf32>, i32 -> vector<16x32xf32>
    %c7_i32 = arith.constant 7 : i32
    %59 = vector.broadcast %c7_i32 : i32 to vector<16x32xi32>
    %60 = arith.cmpi slt, %16, %59 : vector<16x32xi32>
    %cst_24 = arith.constant 0.000000e+00 : f32
    %61 = vector.broadcast %cst_24 : f32 to vector<16x32xf32>
    %62 = arith.select %60, %58, %61 : vector<16x32xi1>, vector<16x32xf32>
    %63 = tpu.concatenate %57, %52, %62, %17 in 1 : vector<16x32xf32>, vector<16x32xf32>, vector<16x32xf32>, vector<16x32xf32> -> vector<16x128xf32>
    %c0_25 = arith.constant 0 : index
    %c96 = arith.constant 96 : index
    %64 = vector.load %arg2[%c0_25, %c96] : memref<128x128xf32, #tpu.memory_space<vmem>>, vector<128x32xf32>
    %cst_26 = arith.constant dense<0.000000e+00> : vector<16x32xf32>
    %65 = tpu.matmul %63, %64, %cst_26 {dimension_numbers = #tpu.dot_dimension_numbers<[1], [0], [0], [1], [0, 0, 1, 1], [], []>} : vector<16x128xf32>, vector<128x32xf32>, vector<16x32xf32> -> vector<16x32xf32>
    %66 = vector.shape_cast %65 : vector<16x32xf32> to vector<2x8x32xf32>
    %c0_27 = arith.constant 0 : index
    %c0_28 = arith.constant 0 : index
    %c0_29 = arith.constant 0 : index
    %67 = vector.load %arg3[%c0_27, %c0_28, %c0_29] : memref<2x8x32xf32, #tpu.memory_space<vmem>>, vector<2x8x32xf32>
    tpu.vector_store %arg3[%c0_27, %c0_28, %c0_29], %66 {strides = array<i32>} : memref<2x8x32xf32, #tpu.memory_space<vmem>>, vector<2x8x32xf32>,
    return
  }
  func.func @transform_0(%arg0: i32) -> (i32, i32, i32) {
    %c0_i32 = arith.constant 0 : i32
    %c0_i32_0 = arith.constant 0 : i32
    %c0_i32_1 = arith.constant 0 : i32
    %c0_i32_2 = arith.constant 0 : i32
    return %c0_i32, %c0_i32_0, %c0_i32_1 : i32, i32, i32
  }
  func.func @transform_1(%arg0: i32) -> (i32, i32) {
    %c0_i32 = arith.constant 0 : i32
    %c0_i32_0 = arith.constant 0 : i32
    %c0_i32_1 = arith.constant 0 : i32
    return %c0_i32, %c0_i32_0 : i32, i32
  }
  func.func @transform_2(%arg0: i32) -> (i32, i32, i32) {
    %c0_i32 = arith.constant 0 : i32
    %c0_i32_0 = arith.constant 0 : i32
    %c0_i32_1 = arith.constant 0 : i32
    %c0_i32_2 = arith.constant 0 : i32
    return %c0_i32, %c0_i32_0, %c0_i32_1 : i32, i32, i32
  }
}

</mosaic_0001>

<llo_original>
// kernel: tpu_custom_call.1
$region0: #{tpu_custom_call.1}
  #allocation0 [shape = 'u32[]', space=smem, size = 0x4, offset = 0x4, fixed_abs, tag = 'smem constant byte address 0x4 - core index']
  #allocation1 [shape = 'u32[144,128]{1,0:T(1,128)}', space=vmem, size = 0x12000, scoped, tag = 'internal scratch']
  %s0 = inlined_call_operand.hbm [shape: f32[2,8,32], index: 0, kind: input, shape index: {}]
  %s1 = inlined_call_operand.hbm [shape: f32[128,128], index: 1, kind: input, shape index: {}]
  %s2 = inlined_call_operand.hbm [shape: f32[2,8,32], index: 2, kind: output, shape index: {}]
  %s3 = sld [smem:[#allocation0]]
  $region26: #{tpu_custom_call.1} parent=0
    _
  %s5 = ssub.s32 1, %s3
  %s6 = scalar_select 0, %s5, %s3
  $region1: #{tpu_custom_call.1} parent=0
    #allocation2 [shape = 'u8[8192]{0}', space=vmem, size = 0x2000, scoped, tag = 'input window, operand 0, single buffered']
    #allocation3 [shape = 's32[1]{0}', space=sflag, size = 0x4, scoped, tag = 'scoped memory for tpu_custom_call.1']
    #allocation4 [shape = 's32[1]{0}', space=sflag, size = 0x4, scoped, tag = 'scoped memory for tpu_custom_call.1']
    #allocation5 [shape = 'u8[65536]{0}', space=vmem, size = 0x10000, scoped, tag = 'input window, operand 1, single buffered']
    #allocation6 [shape = 's32[1]{0}', space=sflag, size = 0x4, scoped, tag = 'scoped memory for tpu_custom_call.1']
    #allocation7 [shape = 'u8[8192]{0}', space=vmem, size = 0x2000, scoped, tag = 'output window, operand 0, single buffered']
    %7 = vsyncpa [#allocation3], 0
    %8 = vsyncpa [#allocation6], 0
    %9 = vsyncpa [#allocation4], 0
    // Predicated region
    $region2: #{tpu_custom_call.1} parent=1 // pred_check
      _
    $region3: #{tpu_custom_call.1} parent=1 // pred_check_branch
      %11 = sbr.rel (0) target = $region5
    $region4: #{tpu_custom_call.1} parent=1 // pred_region
      %s13 = ssub.s32 256, 256
      %14 = vsyncadd [#allocation3], %s13
      %s15 = sshll.u32 [#allocation2], 4
      %s16 = int_to_ptr.vmem [resolvable:$true] %s15
      %21 = dma.hbm_to_vmem [thread:$0]  %s0, 256, %s16, [#allocation3], 128, 128, 8
    $region5: #{tpu_custom_call.1} parent=1 // pred_fallthru
      _
    // Predicated region
    $region6: #{tpu_custom_call.1} parent=1 // pred_check
      _
    $region7: #{tpu_custom_call.1} parent=1 // pred_check_branch
      %23 = sbr.rel (0) target = $region9
    $region8: #{tpu_custom_call.1} parent=1 // pred_region
      %s25 = ssub.s32 2048, 2048
      %26 = vsyncadd [#allocation6], %s25
      %s27 = sshll.u32 [#allocation5], 4
      %s28 = int_to_ptr.vmem [resolvable:$true] %s27
      %33 = dma.hbm_to_vmem [thread:$0]  %s1, 2048, %s28, [#allocation6], 128, 128, 8
    $region9: #{tpu_custom_call.1} parent=1 // pred_fallthru
      _
    // Predicated region
    $region10: #{tpu_custom_call.1} parent=1 // pred_check
      _
    $region11: #{tpu_custom_call.1} parent=1 // pred_check_branch
      %35 = sbr.rel (0) target = $region13
    $region12: #{tpu_custom_call.1} parent=1 // pred_region
      %36 = dma.done [#allocation3], 256
    $region13: #{tpu_custom_call.1} parent=1 // pred_fallthru
      _
    // Predicated region
    $region14: #{tpu_custom_call.1} parent=1 // pred_check
      _
    $region15: #{tpu_custom_call.1} parent=1 // pred_check_branch
      %38 = sbr.rel (0) target = $region17
    $region16: #{tpu_custom_call.1} parent=1 // pred_region
      %39 = dma.done [#allocation6], 2048
    $region17: #{tpu_custom_call.1} parent=1 // pred_fallthru
      _
    %v40 = vlaneseq
    %v41 = vshrl.u32 %v40, 7
    %v42 = vadd.s32 %v41, 8
    %vm43 = vcmp.lt.s32.totalorder %v41, 0
    %v44 = vsub.s32 0, %v41
    %v45 = vsel %vm43, %v44, %v41
    %v46 = vshrl.u32 %v45, 3
    %v47 = vand.u32 %v45, 7
    %v48 = vsub.s32 0, %v47
    %v49 = vsel %vm43, %v48, %v47
    %vm50 = vcmp.lt.s32.totalorder %v42, 0
    %v51 = vsub.s32 0, %v42
    %v52 = vsel %vm50, %v51, %v42
    %v53 = vshrl.u32 %v52, 3
    %v54 = vand.u32 %v52, 7
    %v55 = vsub.s32 0, %v54
    %v56 = vsel %vm50, %v55, %v54
    %vm57 = vcmp.ne.s32.totalorder %v49, 0
    %vm58 = vcmp.ne.s32.totalorder %v56, 0
    %vm59 = vcmp.lt.s32.totalorder %v49, 0
    %vm60 = vcmp.lt.s32.totalorder %v56, 0
    %vm61 = vmand %vm59, %vm57
    %vm62 = vmand %vm60, %vm58
    %v63 = vadd.s32 %v49, 8
    %v64 = vadd.s32 %v56, 8
    %v65 = vsel %vm61, %v63, %v49
    %v66 = vsel %vm62, %v64, %v56
    %v67 = vld [vmem:[#allocation2] sm:$0xff]
    %v68 = vld [vmem:[#allocation2 + $0x8] sm:$0xff]
    %71 = vrot.lane.b32.xlu0 %v67, 32
    %v72 = vpop.permute.xlu0 %71
    %73 = vrot.lane.b32.xlu0 %v68, 32
    %v74 = vpop.permute.xlu0 %73
    %77 = vrot.lane.b32.xlu0 %v67, 64
    %v78 = vpop.permute.xlu0 %77
    %79 = vrot.lane.b32.xlu0 %v68, 64
    %v80 = vpop.permute.xlu0 %79
    %vm83 = vcmask 261120
    %v84 = vsel %vm83, %v67, %v72
    %v85 = vsel %vm83, %v68, %v74
    %vm86 = vcmask 523264
    %v87 = vsel %vm86, %v84, %v78
    %v88 = vsel %vm86, %v85, %v80
    %vm89 = vcmask 785408
    %v90 = vsel %vm89, %v87, 1.0
    %v91 = vsel %vm89, %v88, 1.0
    %v92 = vld [vmem:[#allocation5] sm:$0xff]
    %v93 = vld [vmem:[#allocation5 + $0x8] sm:$0xff]
    %v94 = vld [vmem:[#allocation5 + $0x10] sm:$0xff]
    %v95 = vld [vmem:[#allocation5 + $0x18] sm:$0xff]
    %v96 = vld [vmem:[#allocation5 + $0x20] sm:$0xff]
    %v97 = vld [vmem:[#allocation5 + $0x28] sm:$0xff]
    %v98 = vld [vmem:[#allocation5 + $0x30] sm:$0xff]
    %v99 = vld [vmem:[#allocation5 + $0x38] sm:$0xff]
    %v100 = vld [vmem:[#allocation5 + $0x40] sm:$0xff]
    %v101 = vld [vmem:[#allocation5 + $0x48] sm:$0xff]
    %v102 = vld [vmem:[#allocation5 + $0x50] sm:$0xff]
    %v103 = vld [vmem:[#allocation5 + $0x58] sm:$0xff]
    %v104 = vld [vmem:[#allocation5 + $0x60] sm:$0xff]
    %v105 = vld [vmem:[#allocation5 + $0x68] sm:$0xff]
    %v106 = vld [vmem:[#allocation5 + $0x70] sm:$0xff]
    %v107 = vld [vmem:[#allocation5 + $0x78] sm:$0xff]
    %108 = vmatprep.subr.mxu0 0.0
    %109 = vmatpush1.msra.mxu0 %v107
    %110 = vmatprep.subr.mxu0 0.0
    %111 = vmatpush1.msra.mxu0 %v106
    %112 = vmatprep.subr.mxu0 0.0
    %113 = vmatpush1.msra.mxu0 %v105
    %114 = vmatprep.subr.mxu0 0.0
    %115 = vmatpush1.msra.mxu0 %v104
    %116 = vmatprep.subr.mxu0 0.0
    %117 = vmatpush1.msra.mxu0 %v103
    %118 = vmatprep.subr.mxu0 0.0
    %119 = vmatpush1.msra.mxu0 %v102
    %120 = vmatprep.subr.mxu0 0.0
    %121 = vmatpush1.msra.mxu0 %v101
    %122 = vmatprep.subr.mxu0 0.0
    %123 = vmatpush1.msra.mxu0 %v100
    %124 = vmatprep.subr.mxu0 0.0
    %125 = vmatpush1.msra.mxu0 %v99
    %126 = vmatprep.subr.mxu0 0.0
    %127 = vmatpush1.msra.mxu0 %v98
    %128 = vmatprep.subr.mxu0 0.0
    %129 = vmatpush1.msra.mxu0 %v97
    %130 = vmatprep.subr.mxu0 0.0
    %131 = vmatpush1.msra.mxu0 %v96
    %132 = vmatprep.subr.mxu0 0.0
    %133 = vmatpush1.msra.mxu0 %v95
    %134 = vmatprep.subr.mxu0 0.0
    %135 = vmatpush1.msra.mxu0 %v94
    %136 = vmatprep.subr.mxu0 0.0
    %137 = vmatpush1.msra.mxu0 %v93
    %138 = vmatprep.subr.mxu0 0.0
    %139 = vmatpush1.msra.mxu0 %v92
    %140 = vmatprep.subr.mxu0 0.0
    %141 = vmatpush2.msra.mxu0 0.0
    %142 = vmatprep.subr.mxu0 0.0
    %143 = vmatpush2.msra.mxu0 0.0
    %144 = vmatprep.subr.mxu0 0.0
    %145 = vmatpush2.msra.mxu0 0.0
    %146 = vmatprep.subr.mxu0 0.0
    %147 = vmatpush2.msra.mxu0 0.0
    %148 = vmatprep.subr.mxu0 0.0
    %149 = vmatpush2.msra.mxu0 0.0
    %150 = vmatprep.subr.mxu0 0.0
    %151 = vmatpush2.msra.mxu0 0.0
    %152 = vmatprep.subr.mxu0 0.0
    %153 = vmatpush2.msra.mxu0 0.0
    %154 = vmatprep.subr.mxu0 0.0
    %155 = vmatpush2.msra.mxu0 0.0
    %156 = vmatprep.subr.mxu0 0.0
    %157 = vmatpush2.msra.mxu0 0.0
    %158 = vmatprep.subr.mxu0 0.0
    %159 = vmatpush2.msra.mxu0 0.0
    %160 = vmatprep.subr.mxu0 0.0
    %161 = vmatpush2.msra.mxu0 0.0
    %162 = vmatprep.subr.mxu0 0.0
    %163 = vmatpush2.msra.mxu0 0.0
    %164 = vmatprep.subr.mxu0 0.0
    %165 = vmatpush2.msra.mxu0 0.0
    %166 = vmatprep.subr.mxu0 0.0
    %167 = vmatpush2.msra.mxu0 0.0
    %168 = vmatprep.subr.mxu0 0.0
    %169 = vmatpush2.msra.mxu0 0.0
    %170 = vmatprep.subr.mxu0 0.0
    %171 = vmatpush2.msra.mxu0 0.0
    %172 = vmatprep.mubr.f32.mxu0 0.0
    %173 = vmatmul.mubr.f32.gmra.mxu0 %v90
    %v174 = vpop.f32.mrf.mxu0
    %v175 = vadd.f32 0.0, %v174
    %v176 = vpop.f32.mrf.mxu0
    %177 = vmatprep.mubr.f32.mxu0 0.0
    %178 = vmatmul.mubr.f32.gmra.mxu0 %v91
    %v179 = vpop.f32.mrf.mxu0
    %v180 = vadd.f32 0.0, %v179
    %v181 = vpop.f32.mrf.mxu0
    %182 = vdwg.mxu0
    %v183 = vrot.slane %v175, 4
    %v184 = vrot.slane %v180, 4
    %vm185 = vcmp.lt.s32.totalorder %v41, 4
    %v186 = vsel %vm185, %v183, %v184
    %v187 = vsel %vm185, %v184, %v183
    %vm188 = vcmp.ge.s32.totalorder %v65, 4
    %vm189 = vcmp.ge.s32.totalorder %v66, 4
    %v190 = vsel %vm188, %v187, 0.0
    %v191 = vsel %vm189, %v186, 0.0
    %vm192 = vcmp.lt.s32.totalorder %v65, 4
    %vm193 = vcmp.lt.s32.totalorder %v66, 4
    %v194 = vsel %vm192, %v186, 0.0
    %v195 = vsel %vm193, %v187, 0.0
    %198 = vrot.lane.b32.xlu0 %v175, 32
    %v199 = vpop.permute.xlu0 %198
    %200 = vrot.lane.b32.xlu0 %v180, 32
    %v201 = vpop.permute.xlu0 %200
    %206 = vrot.lane.b32.xlu0 %v194, 64
    %v207 = vpop.permute.xlu0 %206
    %208 = vrot.lane.b32.xlu0 %v195, 64
    %v209 = vpop.permute.xlu0 %208
    %v212 = vsel %vm83, %v190, %v199
    %v213 = vsel %vm83, %v191, %v201
    %v214 = vsel %vm86, %v212, %v207
    %v215 = vsel %vm86, %v213, %v209
    %v216 = vsel %vm89, %v214, 1.0
    %v217 = vsel %vm89, %v215, 1.0
    %234 = vrot.lane.b32.xlu0 %v92, 96
    %v235 = vpop.permute.xlu0 %234
    %236 = vrot.lane.b32.xlu0 %v93, 96
    %v237 = vpop.permute.xlu0 %236
    %238 = vrot.lane.b32.xlu0 %v94, 96
    %v239 = vpop.permute.xlu0 %238
    %240 = vrot.lane.b32.xlu0 %v95, 96
    %v241 = vpop.permute.xlu0 %240
    %242 = vrot.lane.b32.xlu0 %v96, 96
    %v243 = vpop.permute.xlu0 %242
    %244 = vrot.lane.b32.xlu0 %v97, 96
    %v245 = vpop.permute.xlu0 %244
    %246 = vrot.lane.b32.xlu0 %v98, 96
    %v247 = vpop.permute.xlu0 %246
    %248 = vrot.lane.b32.xlu0 %v99, 96
    %v249 = vpop.permute.xlu0 %248
    %250 = vrot.lane.b32.xlu0 %v100, 96
    %v251 = vpop.permute.xlu0 %250
    %252 = vrot.lane.b32.xlu0 %v101, 96
    %v253 = vpop.permute.xlu0 %252
    %254 = vrot.lane.b32.xlu0 %v102, 96
    %v255 = vpop.permute.xlu0 %254
    %256 = vrot.lane.b32.xlu0 %v103, 96
    %v257 = vpop.permute.xlu0 %256
    %258 = vrot.lane.b32.xlu0 %v104, 96
    %v259 = vpop.permute.xlu0 %258
    %260 = vrot.lane.b32.xlu0 %v105, 96
    %v261 = vpop.permute.xlu0 %260
    %262 = vrot.lane.b32.xlu0 %v106, 96
    %v263 = vpop.permute.xlu0 %262
    %264 = vrot.lane.b32.xlu0 %v107, 96
    %v265 = vpop.permute.xlu0 %264
    %282 = vmatprep.subr.mxu0 0.0
    %283 = vmatpush1.msra.mxu0 %v265
    %284 = vmatprep.subr.mxu0 0.0
    %285 = vmatpush1.msra.mxu0 %v263
    %286 = vmatprep.subr.mxu0 0.0
    %287 = vmatpush1.msra.mxu0 %v261
    %288 = vmatprep.subr.mxu0 0.0
    %289 = vmatpush1.msra.mxu0 %v259
    %290 = vmatprep.subr.mxu0 0.0
    %291 = vmatpush1.msra.mxu0 %v257
    %292 = vmatprep.subr.mxu0 0.0
    %293 = vmatpush1.msra.mxu0 %v255
    %294 = vmatprep.subr.mxu0 0.0
    %295 = vmatpush1.msra.mxu0 %v253
    %296 = vmatprep.subr.mxu0 0.0
    %297 = vmatpush1.msra.mxu0 %v251
    %298 = vmatprep.subr.mxu0 0.0
    %299 = vmatpush1.msra.mxu0 %v249
    %300 = vmatprep.subr.mxu0 0.0
    %301 = vmatpush1.msra.mxu0 %v247
    %302 = vmatprep.subr.mxu0 0.0
    %303 = vmatpush1.msra.mxu0 %v245
    %304 = vmatprep.subr.mxu0 0.0
    %305 = vmatpush1.msra.mxu0 %v243
    %306 = vmatprep.subr.mxu0 0.0
    %307 = vmatpush1.msra.mxu0 %v241
    %308 = vmatprep.subr.mxu0 0.0
    %309 = vmatpush1.msra.mxu0 %v239
    %310 = vmatprep.subr.mxu0 0.0
    %311 = vmatpush1.msra.mxu0 %v237
    %312 = vmatprep.subr.mxu0 0.0
    %313 = vmatpush1.msra.mxu0 %v235
    %314 = vmatprep.subr.mxu0 0.0
    %315 = vmatpush2.msra.mxu0 0.0
    %316 = vmatprep.subr.mxu0 0.0
    %317 = vmatpush2.msra.mxu0 0.0
    %318 = vmatprep.subr.mxu0 0.0
    %319 = vmatpush2.msra.mxu0 0.0
    %320 = vmatprep.subr.mxu0 0.0
    %321 = vmatpush2.msra.mxu0 0.0
    %322 = vmatprep.subr.mxu0 0.0
    %323 = vmatpush2.msra.mxu0 0.0
    %324 = vmatprep.subr.mxu0 0.0
    %325 = vmatpush2.msra.mxu0 0.0
    %326 = vmatprep.subr.mxu0 0.0
    %327 = vmatpush2.msra.mxu0 0.0
    %328 = vmatprep.subr.mxu0 0.0
    %329 = vmatpush2.msra.mxu0 0.0
    %330 = vmatprep.subr.mxu0 0.0
    %331 = vmatpush2.msra.mxu0 0.0
    %332 = vmatprep.subr.mxu0 0.0
    %333 = vmatpush2.msra.mxu0 0.0
    %334 = vmatprep.subr.mxu0 0.0
    %335 = vmatpush2.msra.mxu0 0.0
    %336 = vmatprep.subr.mxu0 0.0
    %337 = vmatpush2.msra.mxu0 0.0
    %338 = vmatprep.subr.mxu0 0.0
    %339 = vmatpush2.msra.mxu0 0.0
    %340 = vmatprep.subr.mxu0 0.0
    %341 = vmatpush2.msra.mxu0 0.0
    %342 = vmatprep.subr.mxu0 0.0
    %343 = vmatpush2.msra.mxu0 0.0
    %344 = vmatprep.subr.mxu0 0.0
    %345 = vmatpush2.msra.mxu0 0.0
    %346 = vmatprep.mubr.f32.mxu0 0.0
    %347 = vmatmul.mubr.f32.gmra.mxu0 %v216
    %v348 = vpop.f32.mrf.mxu0
    %v349 = vadd.f32 0.0, %v348
    %v350 = vpop.f32.mrf.mxu0
    %351 = vmatprep.mubr.f32.mxu0 0.0
    %352 = vmatmul.mubr.f32.gmra.mxu0 %v217
    %v353 = vpop.f32.mrf.mxu0
    %v354 = vadd.f32 0.0, %v353
    %v355 = vpop.f32.mrf.mxu0
    %356 = vdwg.mxu0
    %v357 = vmax.f32 %v349, 0.0
    %v358 = vmax.f32 %v354, 0.0
    %v359 = vrot.slane %v357, 6
    %v360 = vrot.slane %v358, 6
    %vm361 = vcmp.lt.s32.totalorder %v41, 2
    %v362 = vsel %vm361, %v359, %v360
    %v363 = vsel %vm361, %v360, %v359
    %vm364 = vcmp.ge.s32.totalorder %v65, 2
    %vm365 = vcmp.ge.s32.totalorder %v66, 2
    %v366 = vsel %vm364, %v363, 0.0
    %v367 = vsel %vm365, %v362, 0.0
    %v368 = vrot.slane %v357, 2
    %v369 = vrot.slane %v358, 2
    %vm370 = vcmp.lt.s32.totalorder %v41, 6
    %v371 = vsel %vm370, %v368, %v369
    %v372 = vsel %vm370, %v369, %v368
    %vm373 = vcmp.lt.s32.totalorder %v65, 6
    %vm374 = vcmp.lt.s32.totalorder %v66, 6
    %v375 = vsel %vm373, %v371, 0.0
    %v376 = vsel %vm374, %v372, 0.0
    %379 = vrot.lane.b32.xlu0 %v357, 32
    %v380 = vpop.permute.xlu0 %379
    %381 = vrot.lane.b32.xlu0 %v358, 32
    %v382 = vpop.permute.xlu0 %381
    %387 = vrot.lane.b32.xlu0 %v375, 64
    %v388 = vpop.permute.xlu0 %387
    %389 = vrot.lane.b32.xlu0 %v376, 64
    %v390 = vpop.permute.xlu0 %389
    %v393 = vsel %vm83, %v366, %v380
    %v394 = vsel %vm83, %v367, %v382
    %v395 = vsel %vm86, %v393, %v388
    %v396 = vsel %vm86, %v394, %v390
    %v397 = vsel %vm89, %v395, 1.0
    %v398 = vsel %vm89, %v396, 1.0
    %399 = vrot.lane.b32.xlu0 %v92, 64
    %v400 = vpop.permute.xlu0 %399
    %401 = vrot.lane.b32.xlu0 %v93, 64
    %v402 = vpop.permute.xlu0 %401
    %403 = vrot.lane.b32.xlu0 %v94, 64
    %v404 = vpop.permute.xlu0 %403
    %405 = vrot.lane.b32.xlu0 %v95, 64
    %v406 = vpop.permute.xlu0 %405
    %407 = vrot.lane.b32.xlu0 %v96, 64
    %v408 = vpop.permute.xlu0 %407
    %409 = vrot.lane.b32.xlu0 %v97, 64
    %v410 = vpop.permute.xlu0 %409
    %411 = vrot.lane.b32.xlu0 %v98, 64
    %v412 = vpop.permute.xlu0 %411
    %413 = vrot.lane.b32.xlu0 %v99, 64
    %v414 = vpop.permute.xlu0 %413
    %415 = vrot.lane.b32.xlu0 %v100, 64
    %v416 = vpop.permute.xlu0 %415
    %417 = vrot.lane.b32.xlu0 %v101, 64
    %v418 = vpop.permute.xlu0 %417
    %419 = vrot.lane.b32.xlu0 %v102, 64
    %v420 = vpop.permute.xlu0 %419
    %421 = vrot.lane.b32.xlu0 %v103, 64
    %v422 = vpop.permute.xlu0 %421
    %423 = vrot.lane.b32.xlu0 %v104, 64
    %v424 = vpop.permute.xlu0 %423
    %425 = vrot.lane.b32.xlu0 %v105, 64
    %v426 = vpop.permute.xlu0 %425
    %427 = vrot.lane.b32.xlu0 %v106, 64
    %v428 = vpop.permute.xlu0 %427
    %429 = vrot.lane.b32.xlu0 %v107, 64
    %v430 = vpop.permute.xlu0 %429
    %447 = vmatprep.subr.mxu0 0.0
    %448 = vmatpush1.msra.mxu0 %v430
    %449 = vmatprep.subr.mxu0 0.0
    %450 = vmatpush1.msra.mxu0 %v428
    %451 = vmatprep.subr.mxu0 0.0
    %452 = vmatpush1.msra.mxu0 %v426
    %453 = vmatprep.subr.mxu0 0.0
    %454 = vmatpush1.msra.mxu0 %v424
    %455 = vmatprep.subr.mxu0 0.0
    %456 = vmatpush1.msra.mxu0 %v422
    %457 = vmatprep.subr.mxu0 0.0
    %458 = vmatpush1.msra.mxu0 %v420
    %459 = vmatprep.subr.mxu0 0.0
    %460 = vmatpush1.msra.mxu0 %v418
    %461 = vmatprep.subr.mxu0 0.0
    %462 = vmatpush1.msra.mxu0 %v416
    %463 = vmatprep.subr.mxu0 0.0
    %464 = vmatpush1.msra.mxu0 %v414
    %465 = vmatprep.subr.mxu0 0.0
    %466 = vmatpush1.msra.mxu0 %v412
    %467 = vmatprep.subr.mxu0 0.0
    %468 = vmatpush1.msra.mxu0 %v410
    %469 = vmatprep.subr.mxu0 0.0
    %470 = vmatpush1.msra.mxu0 %v408
    %471 = vmatprep.subr.mxu0 0.0
    %472 = vmatpush1.msra.mxu0 %v406
    %473 = vmatprep.subr.mxu0 0.0
    %474 = vmatpush1.msra.mxu0 %v404
    %475 = vmatprep.subr.mxu0 0.0
    %476 = vmatpush1.msra.mxu0 %v402
    %477 = vmatprep.subr.mxu0 0.0
    %478 = vmatpush1.msra.mxu0 %v400
    %479 = vmatprep.subr.mxu0 0.0
    %480 = vmatpush2.msra.mxu0 0.0
    %481 = vmatprep.subr.mxu0 0.0
    %482 = vmatpush2.msra.mxu0 0.0
    %483 = vmatprep.subr.mxu0 0.0
    %484 = vmatpush2.msra.mxu0 0.0
    %485 = vmatprep.subr.mxu0 0.0
    %486 = vmatpush2.msra.mxu0 0.0
    %487 = vmatprep.subr.mxu0 0.0
    %488 = vmatpush2.msra.mxu0 0.0
    %489 = vmatprep.subr.mxu0 0.0
    %490 = vmatpush2.msra.mxu0 0.0
    %491 = vmatprep.subr.mxu0 0.0
    %492 = vmatpush2.msra.mxu0 0.0
    %493 = vmatprep.subr.mxu0 0.0
    %494 = vmatpush2.msra.mxu0 0.0
    %495 = vmatprep.subr.mxu0 0.0
    %496 = vmatpush2.msra.mxu0 0.0
    %497 = vmatprep.subr.mxu0 0.0
    %498 = vmatpush2.msra.mxu0 0.0
    %499 = vmatprep.subr.mxu0 0.0
    %500 = vmatpush2.msra.mxu0 0.0
    %501 = vmatprep.subr.mxu0 0.0
    %502 = vmatpush2.msra.mxu0 0.0
    %503 = vmatprep.subr.mxu0 0.0
    %504 = vmatpush2.msra.mxu0 0.0
    %505 = vmatprep.subr.mxu0 0.0
    %506 = vmatpush2.msra.mxu0 0.0
    %507 = vmatprep.subr.mxu0 0.0
    %508 = vmatpush2.msra.mxu0 0.0
    %509 = vmatprep.subr.mxu0 0.0
    %510 = vmatpush2.msra.mxu0 0.0
    %511 = vmatprep.mubr.f32.mxu0 0.0
    %512 = vmatmul.mubr.f32.gmra.mxu0 %v397
    %v513 = vpop.f32.mrf.mxu0
    %v514 = vadd.f32 0.0, %v513
    %v515 = vpop.f32.mrf.mxu0
    %516 = vmatprep.mubr.f32.mxu0 0.0
    %517 = vmatmul.mubr.f32.gmra.mxu0 %v398
    %v518 = vpop.f32.mrf.mxu0
    %v519 = vadd.f32 0.0, %v518
    %v520 = vpop.f32.mrf.mxu0
    %521 = vdwg.mxu0
    %v522 = vmax.f32 %v514, 0.0
    %v523 = vmax.f32 %v519, 0.0
    %v524 = vrot.slane %v522, 7
    %v525 = vrot.slane %v523, 7
    %vm526 = vcmp.lt.s32.totalorder %v41, 1
    %v527 = vsel %vm526, %v524, %v525
    %v528 = vsel %vm526, %v525, %v524
    %vm529 = vcmp.ge.s32.totalorder %v65, 1
    %vm530 = vcmp.ge.s32.totalorder %v66, 1
    %v531 = vsel %vm529, %v528, 0.0
    %v532 = vsel %vm530, %v527, 0.0
    %v533 = vrot.slane %v522, 1
    %v534 = vrot.slane %v523, 1
    %vm535 = vcmp.lt.s32.totalorder %v41, 7
    %v536 = vsel %vm535, %v533, %v534
    %v537 = vsel %vm535, %v534, %v533
    %vm538 = vcmp.lt.s32.totalorder %v65, 7
    %vm539 = vcmp.lt.s32.totalorder %v66, 7
    %v540 = vsel %vm538, %v536, 0.0
    %v541 = vsel %vm539, %v537, 0.0
    %544 = vrot.lane.b32.xlu0 %v522, 32
    %v545 = vpop.permute.xlu0 %544
    %546 = vrot.lane.b32.xlu0 %v523, 32
    %v547 = vpop.permute.xlu0 %546
    %552 = vrot.lane.b32.xlu0 %v540, 64
    %v553 = vpop.permute.xlu0 %552
    %554 = vrot.lane.b32.xlu0 %v541, 64
    %v555 = vpop.permute.xlu0 %554
    %v558 = vsel %vm83, %v531, %v545
    %v559 = vsel %vm83, %v532, %v547
    %v560 = vsel %vm86, %v558, %v553
    %v561 = vsel %vm86, %v559, %v555
    %v562 = vsel %vm89, %v560, 1.0
    %v563 = vsel %vm89, %v561, 1.0
    %564 = vrot.lane.b32.xlu0 %v92, 32
    %v565 = vpop.permute.xlu0 %564
    %566 = vrot.lane.b32.xlu0 %v93, 32
    %v567 = vpop.permute.xlu0 %566
    %568 = vrot.lane.b32.xlu0 %v94, 32
    %v569 = vpop.permute.xlu0 %568
    %570 = vrot.lane.b32.xlu0 %v95, 32
    %v571 = vpop.permute.xlu0 %570
    %572 = vrot.lane.b32.xlu0 %v96, 32
    %v573 = vpop.permute.xlu0 %572
    %574 = vrot.lane.b32.xlu0 %v97, 32
    %v575 = vpop.permute.xlu0 %574
    %576 = vrot.lane.b32.xlu0 %v98, 32
    %v577 = vpop.permute.xlu0 %576
    %578 = vrot.lane.b32.xlu0 %v99, 32
    %v579 = vpop.permute.xlu0 %578
    %580 = vrot.lane.b32.xlu0 %v100, 32
    %v581 = vpop.permute.xlu0 %580
    %582 = vrot.lane.b32.xlu0 %v101, 32
    %v583 = vpop.permute.xlu0 %582
    %584 = vrot.lane.b32.xlu0 %v102, 32
    %v585 = vpop.permute.xlu0 %584
    %586 = vrot.lane.b32.xlu0 %v103, 32
    %v587 = vpop.permute.xlu0 %586
    %588 = vrot.lane.b32.xlu0 %v104, 32
    %v589 = vpop.permute.xlu0 %588
    %590 = vrot.lane.b32.xlu0 %v105, 32
    %v591 = vpop.permute.xlu0 %590
    %592 = vrot.lane.b32.xlu0 %v106, 32
    %v593 = vpop.permute.xlu0 %592
    %594 = vrot.lane.b32.xlu0 %v107, 32
    %v595 = vpop.permute.xlu0 %594
    %612 = vmatprep.subr.mxu0 0.0
    %613 = vmatpush1.msra.mxu0 %v595
    %614 = vmatprep.subr.mxu0 0.0
    %615 = vmatpush1.msra.mxu0 %v593
    %616 = vmatprep.subr.mxu0 0.0
    %617 = vmatpush1.msra.mxu0 %v591
    %618 = vmatprep.subr.mxu0 0.0
    %619 = vmatpush1.msra.mxu0 %v589
    %620 = vmatprep.subr.mxu0 0.0
    %621 = vmatpush1.msra.mxu0 %v587
    %622 = vmatprep.subr.mxu0 0.0
    %623 = vmatpush1.msra.mxu0 %v585
    %624 = vmatprep.subr.mxu0 0.0
    %625 = vmatpush1.msra.mxu0 %v583
    %626 = vmatprep.subr.mxu0 0.0
    %627 = vmatpush1.msra.mxu0 %v581
    %628 = vmatprep.subr.mxu0 0.0
    %629 = vmatpush1.msra.mxu0 %v579
    %630 = vmatprep.subr.mxu0 0.0
    %631 = vmatpush1.msra.mxu0 %v577
    %632 = vmatprep.subr.mxu0 0.0
    %633 = vmatpush1.msra.mxu0 %v575
    %634 = vmatprep.subr.mxu0 0.0
    %635 = vmatpush1.msra.mxu0 %v573
    %636 = vmatprep.subr.mxu0 0.0
    %637 = vmatpush1.msra.mxu0 %v571
    %638 = vmatprep.subr.mxu0 0.0
    %639 = vmatpush1.msra.mxu0 %v569
    %640 = vmatprep.subr.mxu0 0.0
    %641 = vmatpush1.msra.mxu0 %v567
    %642 = vmatprep.subr.mxu0 0.0
    %643 = vmatpush1.msra.mxu0 %v565
    %644 = vmatprep.subr.mxu0 0.0
    %645 = vmatpush2.msra.mxu0 0.0
    %646 = vmatprep.subr.mxu0 0.0
    %647 = vmatpush2.msra.mxu0 0.0
    %648 = vmatprep.subr.mxu0 0.0
    %649 = vmatpush2.msra.mxu0 0.0
    %650 = vmatprep.subr.mxu0 0.0
    %651 = vmatpush2.msra.mxu0 0.0
    %652 = vmatprep.subr.mxu0 0.0
    %653 = vmatpush2.msra.mxu0 0.0
    %654 = vmatprep.subr.mxu0 0.0
    %655 = vmatpush2.msra.mxu0 0.0
    %656 = vmatprep.subr.mxu0 0.0
    %657 = vmatpush2.msra.mxu0 0.0
    %658 = vmatprep.subr.mxu0 0.0
    %659 = vmatpush2.msra.mxu0 0.0
    %660 = vmatprep.subr.mxu0 0.0
    %661 = vmatpush2.msra.mxu0 0.0
    %662 = vmatprep.subr.mxu0 0.0
    %663 = vmatpush2.msra.mxu0 0.0
    %664 = vmatprep.subr.mxu0 0.0
    %665 = vmatpush2.msra.mxu0 0.0
    %666 = vmatprep.subr.mxu0 0.0
    %667 = vmatpush2.msra.mxu0 0.0
    %668 = vmatprep.subr.mxu0 0.0
    %669 = vmatpush2.msra.mxu0 0.0
    %670 = vmatprep.subr.mxu0 0.0
    %671 = vmatpush2.msra.mxu0 0.0
    %672 = vmatprep.subr.mxu0 0.0
    %673 = vmatpush2.msra.mxu0 0.0
    %674 = vmatprep.subr.mxu0 0.0
    %675 = vmatpush2.msra.mxu0 0.0
    %676 = vmatprep.mubr.f32.mxu0 0.0
    %677 = vmatmul.mubr.f32.gmra.mxu0 %v562
    %v678 = vpop.f32.mrf.mxu0
    %v679 = vadd.f32 0.0, %v678
    %v680 = vpop.f32.mrf.mxu0
    %681 = vmatprep.mubr.f32.mxu0 0.0
    %682 = vmatmul.mubr.f32.gmra.mxu0 %v563
    %v683 = vpop.f32.mrf.mxu0
    %v684 = vadd.f32 0.0, %v683
    %v685 = vpop.f32.mrf.mxu0
    %686 = vdwg.mxu0
    %687 = vst.msk [vmem:[#allocation7] sm:$0xff] %vm83, %v679
    %688 = vst.msk [vmem:[#allocation7 + $0x8] sm:$0xff] %vm83, %v684
    // Predicated region
    $region18: #{tpu_custom_call.1} parent=1 // pred_check
      _
    $region19: #{tpu_custom_call.1} parent=1 // pred_check_branch
      %690 = sbr.rel (0) target = $region21
    $region20: #{tpu_custom_call.1} parent=1 // pred_region
      %s692 = ssub.s32 256, 256
      %693 = vsyncadd [#allocation4], %s692
      %s694 = sshll.u32 [#allocation7], 4
      %s695 = int_to_ptr.vmem [resolvable:$true] %s694
      %700 = dma.vmem_to_hbm [thread:$0]  %s695, 256, %s2, [#allocation4], 128, 128, 8
    $region21: #{tpu_custom_call.1} parent=1 // pred_fallthru
      _
    // Predicated region
    $region22: #{tpu_custom_call.1} parent=1 // pred_check
      _
    $region23: #{tpu_custom_call.1} parent=1 // pred_check_branch
      %702 = sbr.rel (0) target = $region25
    $region24: #{tpu_custom_call.1} parent=1 // pred_region
      %703 = dma.done [#allocation4], 256
    $region25: #{tpu_custom_call.1} parent=1 // pred_fallthru
      _
    %704 = vsyncpa [#allocation3], 1
    %705 = vsyncpa [#allocation6], 1
    %706 = vsyncpa [#allocation4], 1

</llo_original>
